<compile_context>
chip_gen: v5e
topology: v5e:2x2
jax: 0.10.0
libtpu: 0.0.40
codegen_flags: <defaults>
</compile_context>

<pallas_src>
import functools
import math

import jax
import jax.numpy as jnp
from jax.experimental import pallas as pl
from jax.experimental.pallas import tpu as pltpu


# ------------------------------- kernel body ---------------------------------

def _cross_neuron_kernel(x_ref,
                         w1i_ref, b1i_ref, w2i_ref, b2i_ref,
                         w1o_ref, b1o_ref, w2o_ref, b2o_ref,
                         o_ref, *, approx_recip, vpu_attention):
    """One (Bt, c, hw) batch tile: fc_in MLP -> channel attention -> fc_out -> residual ReLU."""
    bt_t, c, hw = x_ref.shape
    rows = bt_t * c
    mm = w1i_ref.dtype                      # matmul operand dtype (bf16 or f32)

    # Fold the batch tile into the matmul M dimension (layout-free: c % 8 == 0
    # sublanes, hw % 128 == 0 lanes).  x stays in its native dtype in HBM; the
    # cast to the matmul dtype is in-kernel VPU work.
    X = x_ref[...].reshape(rows, hw)
    Xf = X.astype(jnp.float32)              # full-precision residual path
    Xmm = X.astype(mm)

    # ---- fc_in: Conv1d(hw -> hw/r, k=1) + ReLU + Conv1d(hw/r -> hw, k=1) ----
    V = jnp.dot(Xmm, w1i_ref[...], preferred_element_type=jnp.float32) + b1i_ref[...]
    V = jnp.maximum(V, 0.0)                                   # (rows, hw_r) f32
    Vmm = V.astype(mm)
    V2 = jnp.dot(Vmm, w2i_ref[...], preferred_element_type=jnp.float32) + b2i_ref[...]

    # Spatial mean in f32 via a lane (XLU) reduction -- exact PyTorch semantics,
    # no extra N=1 MXU matvec, no bf16 rounding of the mean.
    m = jnp.mean(V2, axis=-1, keepdims=True)                  # (rows, 1) f32
    m_col = m.reshape(bt_t, c, 1)
    m_row = jnp.transpose(m_col, (0, 2, 1))                   # (Bt, 1, c)

    # Channel attention.  NOTE: score[b,i,j] = -(m_j - m_i)^2 is SYMMETRIC,
    # every entry <= 0 and the diagonal is exactly 0, therefore
    #   (a) the usual row-max softmax stabilization is a no-op (omitted), and
    #   (b) softmax(score, dim=1).T == row-softmax(score, axis=-1).
    # These shortcuts are pinned by an assertion in __main__.
    diff = m_row - m_col                                      # (Bt, c, c)
    e = jnp.exp(-(diff * diff))
    attn_t = e * pl.reciprocal(jnp.sum(e, axis=-1, keepdims=True),
                               approx=approx_recip)

    # torch: bmm(x_v, attn) with x_v = V2.T ; transposed form: attn.T @ V2.
    V2b = V2.reshape(bt_t, c, hw)
    if vpu_attention:
        # Tiny-c path: broadcast-FMA on the VPU (a c x c MXU matmul would use
        # <4-7% of the systolic array); contraction stays in f32.
        Z = jnp.sum(attn_t[..., None] * V2b[:, None, :, :], axis=2)
        Z = Z.reshape(rows, hw)
    else:
        Z = jnp.einsum("bij,bjl->bil", attn_t.astype(mm), V2b.astype(mm),
                       preferred_element_type=jnp.float32).reshape(rows, hw)

    # ---- fc_out: same MLP structure as fc_in ----
    Y = jnp.dot(Z.astype(mm), w1o_ref[...], preferred_element_type=jnp.float32) + b1o_ref[...]
    Y = jnp.maximum(Y, 0.0)
    O = jnp.dot(Y.astype(mm), w2o_ref[...], preferred_element_type=jnp.float32) + b2o_ref[...]

    # dropout(p=0) is a no-op; residual add + ReLU in f32 on the unrounded x.
    out = jnp.maximum(Xf + O, 0.0)
    o_ref[...] = out.reshape(bt_t, c, hw).astype(o_ref.dtype)


# ----------------------- tiling / budgeting heuristics ------------------------

def _tpu_device_kind():
    try:
        return jax.devices()[0].device_kind.lower()
    except Exception:
        return ""


def _tpu_vmem_capacity_bytes(device_kind):
    try:
        cap = int(pltpu.get_tpu_info().vmem_capacity_bytes)
        if cap > 0:
            return cap
    except Exception:
        pass
    return (64 << 20) if "v7" in device_kind else (128 << 20)


def _use_vpu_attention(bt_tile, c, hw):
    """Tiny-c attention runs as VPU broadcast-FMAs if its temp stays small."""
    return c <= 32 and bt_tile * c * c * hw * 4 <= (2 << 20)


def _estimate_tile_bytes(bt_tile, c, hw, hw_r, x_bytes, out_bytes, mm_bytes,
                         vpu_attention):
    """VMEM bytes for one grid step (pipeline buffers + live intermediates)."""
    rows = bt_tile * c
    est = 2 * bt_tile * c * hw * x_bytes        # input block, double-buffered
    est += 2 * bt_tile * c * hw * out_bytes     # output block, double-buffered
    est += 6 * rows * hw * 4                    # f32 (rows, hw) slabs: X, V2, Z, O, out, slack
    est += 2 * rows * hw * mm_bytes             # matmul-dtype casts of the wide slabs
    est += 4 * rows * hw_r * 4                  # hidden-width (rows, hw_r) intermediates
    est += 3 * bt_tile * c * c * 4              # diff / e / attn_t attention tensors
    if vpu_attention:
        est += bt_tile * c * c * hw * 4         # broadcast-FMA temp of the tiny-c path
    return est


def _pick_batch_tile(bt, c, hw, hw_r, *, x_bytes, out_bytes, mm_bytes,
                     act_budget, min_grid=1, pipelined_rows=256):
    """Largest Bt dividing bt whose per-step footprint fits the VMEM budget,
    keeping >= min_grid steps (min_grid=2 only on 2-TensorCore chips), and
    preferring >= 2 steps for DMA/compute overlap when that does not shrink the
    folded MXU M dimension below a couple of MXU passes."""
    candidates = []
    for t in range(1, bt + 1):
        if bt % t:
            continue
        if bt >= min_grid and bt // t < min_grid:
            continue
        est = _estimate_tile_bytes(t, c, hw, hw_r, x_bytes, out_bytes, mm_bytes,
                                   _use_vpu_attention(t, c, hw))
        if est > act_budget:
            continue
        candidates.append(t)
    if not candidates:
        return 1
    best = max(candidates)
    piped = [t for t in candidates if bt // t >= 2 and t * c >= pipelined_rows]
    if piped:
        best = max(piped)
    return best


# ------------------------------- host wrapper ---------------------------------

def cross_neuron_block(x, params, *, matmul_dtype=jnp.bfloat16, out_dtype=None,
                       batch_tile=None, attention="auto", exact_reciprocal=False,
                       dimension_semantics=None, interpret=False):
    """Pallas-backed _CrossNeuronBlock.forward (consistent-size branch)."""
    bt, c, h, w = x.shape
    hw = h * w
    hw_r = params["w1_in"].shape[0]

    # Layout guards: c folds into the sublane axis; hw must stay lane-dense so
    # the output writeback uses unmasked full-lane stores.
    assert c % 8 == 0, f"in_channels={c} must be a multiple of 8 (sublane fold)"
    assert hw % 128 == 0, f"h*w={hw} must be a multiple of 128 (lane-dense I/O)"

    mm = jnp.dtype(matmul_dtype)
    odt = jnp.dtype(out_dtype) if out_dtype is not None else jnp.dtype(x.dtype)

    kind = _tpu_device_kind()
    two_cores = "v7" in kind                       # v7x: 2 TensorCores / chip
    vmem_cap = _tpu_vmem_capacity_bytes(kind)      # 128 MiB v5e/v6e, 64 MiB v7x
    vmem_cap_limit = int(0.82 * vmem_cap)          # ~105 MiB / ~52 MiB usable

    # Weights/biases are single-buffered (pl.Buffered(1)): count them once,
    # with lane padding of the narrow (hw, hw_r) operands.
    wgt_bytes = (2 * hw * max(hw_r, 128) * mm.itemsize     # w1_in, w1_out
                 + 2 * hw_r * hw * mm.itemsize             # w2_in, w2_out
                 + 2 * 8 * (hw + max(hw_r, 128)) * 4)      # f32 biases (padded)

    if batch_tile is None:
        act_budget = max(int(vmem_cap_limit / 1.35) - wgt_bytes, 4 << 20)
        min_grid = 2 if (two_cores and bt >= 2) else 1     # 1-TC chips keep full fold
        Bt = _pick_batch_tile(bt, c, hw, hw_r,
                              x_bytes=x.dtype.itemsize, out_bytes=odt.itemsize,
                              mm_bytes=mm.itemsize, act_budget=act_budget,
                              min_grid=min_grid)
    else:
        Bt = int(batch_tile)
    assert bt % Bt == 0, "batch tile must divide the batch"
    grid_n = bt // Bt

    if attention == "auto":
        vpu_attn = _use_vpu_attention(Bt, c, hw)
    else:
        assert attention in ("vpu", "mxu")
        vpu_attn = attention == "vpu"

    tile_bytes = _estimate_tile_bytes(Bt, c, hw, hw_r, x.dtype.itemsize,
                                      odt.itemsize, mm.itemsize, vpu_attn)
    vmem_limit = int(min(max(int(1.3 * (wgt_bytes + tile_bytes)), 32 << 20),
                         vmem_cap_limit))

    if dimension_semantics is None:
        if two_cores and grid_n >= 2 and grid_n % 2 == 0:
            # Real 2-TensorCore sharding of the batch grid on v7x.
            dimension_semantics = (pltpu.CORE_PARALLEL,)
        else:
            dimension_semantics = ("parallel",)

    # Host-side prep touches only the tiny weights; x is passed in its NATIVE
    # dtype (no extra HBM read/write pass), reshape is a layout-free view.
    w1i = params["w1_in"].T.astype(mm)                    # (hw, hw_r)
    w2i = params["w2_in"].T.astype(mm)                    # (hw_r, hw)
    w1o = params["w1_out"].T.astype(mm)
    w2o = params["w2_out"].T.astype(mm)
    b1i = params["b1_in"].reshape(1, -1).astype(jnp.float32)
    b2i = params["b2_in"].reshape(1, -1).astype(jnp.float32)
    b1o = params["b1_out"].reshape(1, -1).astype(jnp.float32)
    b2o = params["b2_out"].reshape(1, -1).astype(jnp.float32)
    x3 = x.reshape(bt, c, hw)

    def const_spec(shape):
        # Constant index map (fetched once) + single buffering (half the VMEM).
        return pl.BlockSpec(shape, lambda b, _n=len(shape): (0,) * _n,
                            pipeline_mode=pl.Buffered(1))

    in_specs = [
        pl.BlockSpec((Bt, c, hw), lambda b: (b, 0, 0)),
        const_spec((hw, hw_r)), const_spec((1, hw_r)),
        const_spec((hw_r, hw)), const_spec((1, hw)),
        const_spec((hw, hw_r)), const_spec((1, hw_r)),
        const_spec((hw_r, hw)), const_spec((1, hw)),
    ]

    kernel = functools.partial(_cross_neuron_kernel,
                               approx_recip=not exact_reciprocal,
                               vpu_attention=vpu_attn)
    out = pl.pallas_call(
        kernel,
        out_shape=jax.ShapeDtypeStruct((bt, c, hw), odt),
        grid_spec=pl.GridSpec(
            grid=(grid_n,),
            in_specs=in_specs,
            out_specs=pl.BlockSpec((Bt, c, hw), lambda b: (b, 0, 0)),
        ),
        compiler_params=pltpu.CompilerParams(
            dimension_semantics=dimension_semantics,
            vmem_limit_bytes=vmem_limit),
        interpret=interpret,
    )(x3, w1i, b1i, w2i, b2i, w1o, b1o, w2o, b2o)
    return out.reshape(bt, c, h, w)


def cross_neuron_wrapper(x, params, block_fn=None, **kwargs):
    """CrossNeuronWrapper.forward: x = cn(x); x = block(x)."""
    # TODO(synk): the wrapped `block` module is user-supplied in PyTorch; identity is used here.
    y = cross_neuron_block(x, params, **kwargs)
    if block_fn is not None:
        y = block_fn(y)
    return y


# ---------------- plain-JAX glue: parameters, diagnostics, reference ----------------

def init_params(key, hw, hw_r):
    """Deterministic Kaiming-normal weights / uniform biases (shapes match the Conv1d layers)."""
    ks = jax.random.split(key, 8)

    def kaiming(k, shape):                      # Conv1d weight (out, in, 1) -> squeezed (out, in)
        fan_in = shape[1]
        return jax.random.normal(k, shape, jnp.float32) * math.sqrt(2.0 / fan_in)

    def bias(k, n, fan_in):
        bound = 1.0 / math.sqrt(fan_in)
        return jax.random.uniform(k, (n,), jnp.float32, -bound, bound)

    return dict(
        w1_in=kaiming(ks[0], (hw_r, hw)),  b1_in=bias(ks[1], hw_r, hw),
        w2_in=kaiming(ks[2], (hw, hw_r)),  b2_in=bias(ks[3], hw, hw_r),
        w1_out=kaiming(ks[4], (hw_r, hw)), b1_out=bias(ks[5], hw_r, hw),
        w2_out=kaiming(ks[6], (hw, hw_r)), b2_out=bias(ks[7], hw, hw_r),
    )


def compute_correlation(x):
    """Mirror of _compute_correlation (diagnostic scalar; does not affect the output)."""
    b, c, h, w = x.shape
    xv = x.reshape(b, c, -1).astype(jnp.float32)
    xm = xv.mean(axis=1, keepdims=True)
    xc = xv - xm
    num = jnp.einsum("bcl,bdl->bcd", xc, xc)
    xmode = jnp.sqrt(jnp.sum(xc ** 2, axis=2))[:, :, None]
    dec = jnp.einsum("bcx,bdx->bcd", xmode, xmode)
    return jnp.abs(num / dec).mean()


def reference_forward(x, params):
    """Pure-JAX transcription of the PyTorch forward (consistent-size branch) for checking."""
    bt, c, h, w = x.shape
    hw = h * w
    xv = jnp.transpose(x.reshape(bt, c, hw), (0, 2, 1))                 # (bt, hw, c)

    def mlp(v, W1, b1, W2, b2):
        y = jnp.einsum("oi,bil->bol", W1, v) + b1[None, :, None]
        y = jnp.maximum(y, 0.0)
        return jnp.einsum("oi,bil->bol", W2, y) + b2[None, :, None]

    xv = mlp(xv, params["w1_in"], params["b1_in"], params["w2_in"], params["b2_in"])
    xm = xv.mean(axis=1)[:, None, :]                                    # (bt, 1, c)
    score = -(xm - jnp.transpose(xm, (0, 2, 1))) ** 2                   # (bt, c, c)
    attn = jax.nn.softmax(score, axis=1)
    out = jnp.einsum("blc,bcd->bld", xv, attn)                          # (bt, hw, c)
    out = mlp(out, params["w1_out"], params["b1_out"], params["w2_out"], params["b2_out"])
    out = jnp.transpose(out, (0, 2, 1)).reshape(bt, c, h, w)
    return jnp.maximum(x + out, 0.0)


if __name__ == "__main__":
    # in_channels=8 (<=512 -> nblocks_channel=1); spatial_height=spatial_width=32 > h,w
    # -> factor=0 -> spatial_area = h*w = 256 (the "consistent size" forward branch).
    bt, c, h, w = 2, 8, 16, 16
    reduction = 8
    hw = h * w
    hw_r = hw // reduction

    key = jax.random.PRNGKey(0)
    kx, kp = jax.random.split(key)
    x = jax.random.normal(kx, (bt, c, h, w), jnp.float32)
    params = init_params(kp, hw, hw_r)

    ref = reference_forward(x, params)

    # Pin the algebraic shortcuts used in-kernel: score is symmetric with a zero
    # diagonal, so the row max is exactly 0 (no max-subtraction needed) and
    # softmax(score, dim=1).T == row-softmax(score, axis=-1).
    mt = jax.random.normal(jax.random.PRNGKey(1), (3, c), jnp.float32)
    sc = -(mt[:, None, :] - mt[:, :, None]) ** 2
    assert bool(jnp.all(jnp.max(sc, axis=-1) == 0.0))
    assert jnp.allclose(jnp.transpose(jax.nn.softmax(sc, axis=1), (0, 2, 1)),
                        jax.nn.softmax(sc, axis=-1), atol=1e-6)

    # (a) f32 bit-tight configuration, MXU attention path.
    out_mxu = jax.block_until_ready(cross_neuron_wrapper(
        x, params, matmul_dtype=jnp.float32, exact_reciprocal=True, attention="mxu"))
    assert out_mxu.shape == x.shape
    assert jnp.allclose(out_mxu, ref, atol=2e-4, rtol=2e-4), \
        "Pallas f32/MXU output mismatch vs reference"

    # (b) f32 bit-tight configuration, tiny-c VPU attention path.
    out_vpu = jax.block_until_ready(cross_neuron_wrapper(
        x, params, matmul_dtype=jnp.float32, exact_reciprocal=True, attention="vpu"))
    assert jnp.allclose(out_vpu, ref, atol=2e-4, rtol=2e-4), \
        "Pallas f32/VPU output mismatch vs reference"

    # (c) production configuration (all chip gens): bf16 matmul operands, approx
    # EUP reciprocal, bf16 output stream; bias/ReLU/softmax/residual stay f32.
    out_prod = jax.block_until_ready(cross_neuron_wrapper(
        x, params, out_dtype=jnp.bfloat16))
    assert out_prod.shape == x.shape and out_prod.dtype == jnp.bfloat16
    max_err = float(jnp.max(jnp.abs(out_prod.astype(jnp.float32) - ref)))
    assert max_err < 0.25, f"Pallas bf16 output too far from reference: {max_err}"

    # diagnostic correlations (mirrors _compute_correlation)
    corr_bf = compute_correlation(x)
    corr_af = compute_correlation(out_mxu)
    assert bool(jnp.isfinite(corr_bf)) and bool(jnp.isfinite(corr_af))

    print("KERNEL_OK")
</pallas_src>

<mosaic_0001>
module attributes {stable_mosaic.version = 11 : i64} {
  func.func @_cross_neuron_kernel(%arg0: i32, %arg1: memref<2x8x256xf32, #tpu.memory_space<vmem>>, %arg2: memref<256x32xf32, #tpu.memory_space<vmem>>, %arg3: memref<1x32xf32, #tpu.memory_space<vmem>>, %arg4: memref<32x256xf32, #tpu.memory_space<vmem>>, %arg5: memref<1x256xf32, #tpu.memory_space<vmem>>, %arg6: memref<256x32xf32, #tpu.memory_space<vmem>>, %arg7: memref<1x32xf32, #tpu.memory_space<vmem>>, %arg8: memref<32x256xf32, #tpu.memory_space<vmem>>, %arg9: memref<1x256xf32, #tpu.memory_space<vmem>>, %arg10: memref<2x8x256xf32, #tpu.memory_space<vmem>>) attributes {dimension_semantics = [#tpu.dimension_semantics<parallel>], iteration_bounds = array<i64: 1>, scalar_prefetch = 0 : i64, scratch_operands = 0 : i64, tpu.core_type = #tpu.core_type<tc>, window_params = [{transform_indices = @transform_0, window_bounds = array<i64: 2, 8, 256>}, {pipeline_mode = #tpu.pipeline_mode<synchronous>, transform_indices = @transform_1, window_bounds = array<i64: 256, 32>}, {pipeline_mode = #tpu.pipeline_mode<synchronous>, transform_indices = @transform_2, window_bounds = array<i64: 1, 32>}, {pipeline_mode = #tpu.pipeline_mode<synchronous>, transform_indices = @transform_3, window_bounds = array<i64: 32, 256>}, {pipeline_mode = #tpu.pipeline_mode<synchronous>, transform_indices = @transform_4, window_bounds = array<i64: 1, 256>}, {pipeline_mode = #tpu.pipeline_mode<synchronous>, transform_indices = @transform_5, window_bounds = array<i64: 256, 32>}, {pipeline_mode = #tpu.pipeline_mode<synchronous>, transform_indices = @transform_6, window_bounds = array<i64: 1, 32>}, {pipeline_mode = #tpu.pipeline_mode<synchronous>, transform_indices = @transform_7, window_bounds = array<i64: 32, 256>}, {pipeline_mode = #tpu.pipeline_mode<synchronous>, transform_indices = @transform_8, window_bounds = array<i64: 1, 256>}, {transform_indices = @transform_9, window_bounds = array<i64: 2, 8, 256>}]} {
    %c0 = arith.constant 0 : index
    %c0_0 = arith.constant 0 : index
    %c0_1 = arith.constant 0 : index
    %0 = vector.load %arg1[%c0, %c0_0, %c0_1] : memref<2x8x256xf32, #tpu.memory_space<vmem>>, vector<2x8x256xf32>
    %1 = vector.shape_cast %0 : vector<2x8x256xf32> to vector<16x256xf32>
    %c0_2 = arith.constant 0 : index
    %c0_3 = arith.constant 0 : index
    %2 = vector.load %arg2[%c0_2, %c0_3] : memref<256x32xf32, #tpu.memory_space<vmem>>, vector<256x32xf32>
    %cst = arith.constant dense<0.000000e+00> : vector<16x32xf32>
    %3 = tpu.matmul %1, %2, %cst {dimension_numbers = #tpu.dot_dimension_numbers<[1], [0], [0], [1], [0, 0, 1, 1], [], []>} : vector<16x256xf32>, vector<256x32xf32>, vector<16x32xf32> -> vector<16x32xf32>
    %c0_4 = arith.constant 0 : index
    %c0_5 = arith.constant 0 : index
    %4 = vector.load %arg3[%c0_4, %c0_5] : memref<1x32xf32, #tpu.memory_space<vmem>>, vector<1x32xf32>
    %5 = vector.broadcast %4 : vector<1x32xf32> to vector<16x32xf32>
    %6 = arith.addf %3, %5 : vector<16x32xf32>
    %cst_6 = arith.constant 0.000000e+00 : f32
    %7 = vector.broadcast %cst_6 : f32 to vector<16x32xf32>
    %8 = arith.maximumf %6, %7 : vector<16x32xf32>
    %c0_7 = arith.constant 0 : index
    %c0_8 = arith.constant 0 : index
    %9 = vector.load %arg4[%c0_7, %c0_8] : memref<32x256xf32, #tpu.memory_space<vmem>>, vector<32x256xf32>
    %cst_9 = arith.constant dense<0.000000e+00> : vector<16x256xf32>
    %10 = tpu.matmul %8, %9, %cst_9 {dimension_numbers = #tpu.dot_dimension_numbers<[1], [0], [0], [1], [0, 0, 1, 1], [], []>} : vector<16x32xf32>, vector<32x256xf32>, vector<16x256xf32> -> vector<16x256xf32>
    %c0_10 = arith.constant 0 : index
    %c0_11 = arith.constant 0 : index
    %11 = vector.load %arg5[%c0_10, %c0_11] : memref<1x256xf32, #tpu.memory_space<vmem>>, vector<1x256xf32>
    %12 = vector.broadcast %11 : vector<1x256xf32> to vector<16x256xf32>
    %13 = arith.addf %10, %12 : vector<16x256xf32>
    %cst_12 = arith.constant dense<0.000000e+00> : vector<16xf32>
    %14 = vector.multi_reduction <add>, %13, %cst_12 [1] : vector<16x256xf32> to vector<16xf32>
    %15 = vector.shape_cast %14 : vector<16xf32> to vector<16x1xf32>
    %cst_13 = arith.constant 2.560000e+02 : f32
    %16 = vector.broadcast %cst_13 : f32 to vector<16x1xf32>
    %17 = arith.divf %15, %16 : vector<16x1xf32>
    %18 = vector.shape_cast %17 : vector<16x1xf32> to vector<2x8x1xf32>
    %19 = tpu.transpose %18, [0, 2, 1] : vector<2x8x1xf32> -> vector<2x1x8xf32>
    %20 = vector.broadcast %19 : vector<2x1x8xf32> to vector<2x8x8xf32>
    %21 = vector.broadcast %18 : vector<2x8x1xf32> to vector<2x8x8xf32>
    %22 = arith.subf %20, %21 : vector<2x8x8xf32>
    %23 = arith.mulf %22, %22 : vector<2x8x8xf32>
    %cst_14 = arith.constant 0.000000e+00 : f32
    %24 = vector.broadcast %cst_14 : f32 to vector<2x8x8xf32>
    %25 = arith.subf %24, %23 : vector<2x8x8xf32>
    %26 = math.exp %25 : vector<2x8x8xf32>
    %cst_15 = arith.constant dense<0.000000e+00> : vector<2x8xf32>
    %27 = vector.multi_reduction <add>, %26, %cst_15 [2] : vector<2x8x8xf32> to vector<2x8xf32>
    %28 = vector.shape_cast %27 : vector<2x8xf32> to vector<2x8x1xf32>
    %29 = tpu.reciprocal %28 : vector<2x8x1xf32> -> vector<2x8x1xf32>
    %30 = vector.broadcast %29 : vector<2x8x1xf32> to vector<2x8x8xf32>
    %31 = arith.mulf %26, %30 : vector<2x8x8xf32>
    %32 = vector.shape_cast %13 : vector<16x256xf32> to vector<2x8x256xf32>
    "tpu.trace_start"() <{level = 10 : i32, message = "bij,bjl->bil"}> : () -> ()
    %cst_16 = arith.constant dense<0.000000e+00> : vector<2x8x256xf32>
    %33 = tpu.matmul %31, %32, %cst_16 {dimension_numbers = #tpu.dot_dimension_numbers<[2], [1], [1], [2], [0, 0, 0, 1, 1, 2], [0], [0]>} : vector<2x8x8xf32>, vector<2x8x256xf32>, vector<2x8x256xf32> -> vector<2x8x256xf32>
    "tpu.trace_stop"() : () -> ()
    %34 = vector.shape_cast %33 : vector<2x8x256xf32> to vector<16x256xf32>
    %c0_17 = arith.constant 0 : index
    %c0_18 = arith.constant 0 : index
    %35 = vector.load %arg6[%c0_17, %c0_18] : memref<256x32xf32, #tpu.memory_space<vmem>>, vector<256x32xf32>
    %cst_19 = arith.constant dense<0.000000e+00> : vector<16x32xf32>
    %36 = tpu.matmul %34, %35, %cst_19 {dimension_numbers = #tpu.dot_dimension_numbers<[1], [0], [0], [1], [0, 0, 1, 1], [], []>} : vector<16x256xf32>, vector<256x32xf32>, vector<16x32xf32> -> vector<16x32xf32>
    %c0_20 = arith.constant 0 : index
    %c0_21 = arith.constant 0 : index
    %37 = vector.load %arg7[%c0_20, %c0_21] : memref<1x32xf32, #tpu.memory_space<vmem>>, vector<1x32xf32>
    %38 = vector.broadcast %37 : vector<1x32xf32> to vector<16x32xf32>
    %39 = arith.addf %36, %38 : vector<16x32xf32>
    %cst_22 = arith.constant 0.000000e+00 : f32
    %40 = vector.broadcast %cst_22 : f32 to vector<16x32xf32>
    %41 = arith.maximumf %39, %40 : vector<16x32xf32>
    %c0_23 = arith.constant 0 : index
    %c0_24 = arith.constant 0 : index
    %42 = vector.load %arg8[%c0_23, %c0_24] : memref<32x256xf32, #tpu.memory_space<vmem>>, vector<32x256xf32>
    %cst_25 = arith.constant dense<0.000000e+00> : vector<16x256xf32>
    %43 = tpu.matmul %41, %42, %cst_25 {dimension_numbers = #tpu.dot_dimension_numbers<[1], [0], [0], [1], [0, 0, 1, 1], [], []>} : vector<16x32xf32>, vector<32x256xf32>, vector<16x256xf32> -> vector<16x256xf32>
    %c0_26 = arith.constant 0 : index
    %c0_27 = arith.constant 0 : index
    %44 = vector.load %arg9[%c0_26, %c0_27] : memref<1x256xf32, #tpu.memory_space<vmem>>, vector<1x256xf32>
    %45 = vector.broadcast %44 : vector<1x256xf32> to vector<16x256xf32>
    %46 = arith.addf %43, %45 : vector<16x256xf32>
    %47 = arith.addf %1, %46 : vector<16x256xf32>
    %cst_28 = arith.constant 0.000000e+00 : f32
    %48 = vector.broadcast %cst_28 : f32 to vector<16x256xf32>
    %49 = arith.maximumf %47, %48 : vector<16x256xf32>
    %50 = vector.shape_cast %49 : vector<16x256xf32> to vector<2x8x256xf32>
    %c0_29 = arith.constant 0 : index
    %c0_30 = arith.constant 0 : index
    %c0_31 = arith.constant 0 : index
    %51 = vector.load %arg10[%c0_29, %c0_30, %c0_31] : memref<2x8x256xf32, #tpu.memory_space<vmem>>, vector<2x8x256xf32>
    tpu.vector_store %arg10[%c0_29, %c0_30, %c0_31], %50 {strides = array<i32>} : memref<2x8x256xf32, #tpu.memory_space<vmem>>, vector<2x8x256xf32>,
    return
  }
  func.func @transform_0(%arg0: i32) -> (i32, i32, i32) {
    %c0_i32 = arith.constant 0 : i32
    %c0_i32_0 = arith.constant 0 : i32
    %c0_i32_1 = arith.constant 0 : i32
    return %arg0, %c0_i32, %c0_i32_0 : i32, i32, i32
  }
  func.func @transform_1(%arg0: i32) -> (i32, i32) {
    %c0_i32 = arith.constant 0 : i32
    %c0_i32_0 = arith.constant 0 : i32
    %c0_i32_1 = arith.constant 0 : i32
    return %c0_i32, %c0_i32_0 : i32, i32
  }
  func.func @transform_2(%arg0: i32) -> (i32, i32) {
    %c0_i32 = arith.constant 0 : i32
    %c0_i32_0 = arith.constant 0 : i32
    %c0_i32_1 = arith.constant 0 : i32
    return %c0_i32, %c0_i32_0 : i32, i32
  }
  func.func @transform_3(%arg0: i32) -> (i32, i32) {
    %c0_i32 = arith.constant 0 : i32
    %c0_i32_0 = arith.constant 0 : i32
    %c0_i32_1 = arith.constant 0 : i32
    return %c0_i32, %c0_i32_0 : i32, i32
  }
  func.func @transform_4(%arg0: i32) -> (i32, i32) {
    %c0_i32 = arith.constant 0 : i32
    %c0_i32_0 = arith.constant 0 : i32
    %c0_i32_1 = arith.constant 0 : i32
    return %c0_i32, %c0_i32_0 : i32, i32
  }
  func.func @transform_5(%arg0: i32) -> (i32, i32) {
    %c0_i32 = arith.constant 0 : i32
    %c0_i32_0 = arith.constant 0 : i32
    %c0_i32_1 = arith.constant 0 : i32
    return %c0_i32, %c0_i32_0 : i32, i32
  }
  func.func @transform_6(%arg0: i32) -> (i32, i32) {
    %c0_i32 = arith.constant 0 : i32
    %c0_i32_0 = arith.constant 0 : i32
    %c0_i32_1 = arith.constant 0 : i32
    return %c0_i32, %c0_i32_0 : i32, i32
  }
  func.func @transform_7(%arg0: i32) -> (i32, i32) {
    %c0_i32 = arith.constant 0 : i32
    %c0_i32_0 = arith.constant 0 : i32
    %c0_i32_1 = arith.constant 0 : i32
    return %c0_i32, %c0_i32_0 : i32, i32
  }
  func.func @transform_8(%arg0: i32) -> (i32, i32) {
    %c0_i32 = arith.constant 0 : i32
    %c0_i32_0 = arith.constant 0 : i32
    %c0_i32_1 = arith.constant 0 : i32
    return %c0_i32, %c0_i32_0 : i32, i32
  }
  func.func @transform_9(%arg0: i32) -> (i32, i32, i32) {
    %c0_i32 = arith.constant 0 : i32
    %c0_i32_0 = arith.constant 0 : i32
    %c0_i32_1 = arith.constant 0 : i32
    return %arg0, %c0_i32, %c0_i32_0 : i32, i32, i32
  }
}

</mosaic_0001>

<llo_original>
// kernel: tpu_custom_call.1
$region0: #{tpu_custom_call.1}
  #allocation0 [shape = 'u32[]', space=smem, size = 0x4, offset = 0x4, fixed_abs, tag = 'smem constant byte address 0x4 - core index']
  #allocation1 [shape = 'u32[72,128]{1,0:T(1,128)}', space=vmem, size = 0x9000, scoped, tag = 'internal scratch']
  %s0 = inlined_call_operand.vmem [shape: f32[2,8,256], index: 0, kind: input, shape index: {}]
  %s1 = inlined_call_operand.vmem [shape: f32[256,32], index: 1, kind: input, shape index: {}]
  %s2 = inlined_call_operand.vmem [shape: f32[1,32], index: 2, kind: input, shape index: {}]
  %s3 = inlined_call_operand.vmem [shape: f32[32,256], index: 3, kind: input, shape index: {}]
  %s4 = inlined_call_operand.vmem [shape: f32[1,256], index: 4, kind: input, shape index: {}]
  %s5 = inlined_call_operand.vmem [shape: f32[256,32], index: 5, kind: input, shape index: {}]
  %s6 = inlined_call_operand.vmem [shape: f32[1,32], index: 6, kind: input, shape index: {}]
  %s7 = inlined_call_operand.vmem [shape: f32[32,256], index: 7, kind: input, shape index: {}]
  %s8 = inlined_call_operand.vmem [shape: f32[1,256], index: 8, kind: input, shape index: {}]
  %s9 = inlined_call_operand.hbm [shape: f32[2,8,256], index: 9, kind: output, shape index: {}]
  %s10 = sld [smem:[#allocation0]]
  $region46: #{tpu_custom_call.1} parent=0
    _
  %s12 = ssub.s32 1, %s10
  %s13 = scalar_select 0, %s12, %s10
  $region1: #{tpu_custom_call.1} parent=0
    #allocation2 [shape = 'u8[16384]{0}', space=vmem, size = 0x4000, scoped, tag = 'output window, operand 0, single buffered']
    #allocation3 [shape = 's32[1]{0}', space=sflag, size = 0x4, scoped, tag = 'scoped memory for tpu_custom_call.1']
    %14 = vsyncpa [#allocation3], 0
    // Predicated region
    $region2: #{tpu_custom_call.1} parent=1 // pred_check
      _
    $region3: #{tpu_custom_call.1} parent=1 // pred_check_branch
      %16 = sbr.rel (0) target = $region5
    $region4: #{tpu_custom_call.1} parent=1 // pred_region
      _
    $region5: #{tpu_custom_call.1} parent=1 // pred_fallthru
      _
    // Predicated region
    $region6: #{tpu_custom_call.1} parent=1 // pred_check
      _
    $region7: #{tpu_custom_call.1} parent=1 // pred_check_branch
      %18 = sbr.rel (0) target = $region9
    $region8: #{tpu_custom_call.1} parent=1 // pred_region
      _
    $region9: #{tpu_custom_call.1} parent=1 // pred_fallthru
      _
    // Predicated region
    $region10: #{tpu_custom_call.1} parent=1 // pred_check
      _
    $region11: #{tpu_custom_call.1} parent=1 // pred_check_branch
      %20 = sbr.rel (0) target = $region13
    $region12: #{tpu_custom_call.1} parent=1 // pred_region
      _
    $region13: #{tpu_custom_call.1} parent=1 // pred_fallthru
      _
    // Predicated region
    $region14: #{tpu_custom_call.1} parent=1 // pred_check
      _
    $region15: #{tpu_custom_call.1} parent=1 // pred_check_branch
      %22 = sbr.rel (0) target = $region17
    $region16: #{tpu_custom_call.1} parent=1 // pred_region
      _
    $region17: #{tpu_custom_call.1} parent=1 // pred_fallthru
      _
    // Predicated region
    $region18: #{tpu_custom_call.1} parent=1 // pred_check
      _
    $region19: #{tpu_custom_call.1} parent=1 // pred_check_branch
      %24 = sbr.rel (0) target = $region21
    $region20: #{tpu_custom_call.1} parent=1 // pred_region
      _
    $region21: #{tpu_custom_call.1} parent=1 // pred_fallthru
      _
    // Predicated region
    $region22: #{tpu_custom_call.1} parent=1 // pred_check
      _
    $region23: #{tpu_custom_call.1} parent=1 // pred_check_branch
      %26 = sbr.rel (0) target = $region25
    $region24: #{tpu_custom_call.1} parent=1 // pred_region
      _
    $region25: #{tpu_custom_call.1} parent=1 // pred_fallthru
      _
    // Predicated region
    $region26: #{tpu_custom_call.1} parent=1 // pred_check
      _
    $region27: #{tpu_custom_call.1} parent=1 // pred_check_branch
      %28 = sbr.rel (0) target = $region29
    $region28: #{tpu_custom_call.1} parent=1 // pred_region
      _
    $region29: #{tpu_custom_call.1} parent=1 // pred_fallthru
      _
    // Predicated region
    $region30: #{tpu_custom_call.1} parent=1 // pred_check
      _
    $region31: #{tpu_custom_call.1} parent=1 // pred_check_branch
      %30 = sbr.rel (0) target = $region33
    $region32: #{tpu_custom_call.1} parent=1 // pred_region
      _
    $region33: #{tpu_custom_call.1} parent=1 // pred_fallthru
      _
    // Predicated region
    $region34: #{tpu_custom_call.1} parent=1 // pred_check
      _
    $region35: #{tpu_custom_call.1} parent=1 // pred_check_branch
      %32 = sbr.rel (0) target = $region37
    $region36: #{tpu_custom_call.1} parent=1 // pred_region
      _
    $region37: #{tpu_custom_call.1} parent=1 // pred_fallthru
      _
    %v33 = vld [vmem:[%s0] sm:$0xff]
    %v34 = vld [vmem:[%s0 + $0x8] sm:$0xff]
    %v35 = vld [vmem:[%s0 + $0x10] sm:$0xff]
    %v36 = vld [vmem:[%s0 + $0x18] sm:$0xff]
    %v37 = vld [vmem:[%s1] sm:$0xff]
    %v38 = vld [vmem:[%s1 + $0x8] sm:$0xff]
    %v39 = vld [vmem:[%s1 + $0x10] sm:$0xff]
    %v40 = vld [vmem:[%s1 + $0x18] sm:$0xff]
    %v41 = vld [vmem:[%s1 + $0x20] sm:$0xff]
    %v42 = vld [vmem:[%s1 + $0x28] sm:$0xff]
    %v43 = vld [vmem:[%s1 + $0x30] sm:$0xff]
    %v44 = vld [vmem:[%s1 + $0x38] sm:$0xff]
    %v45 = vld [vmem:[%s1 + $0x40] sm:$0xff]
    %v46 = vld [vmem:[%s1 + $0x48] sm:$0xff]
    %v47 = vld [vmem:[%s1 + $0x50] sm:$0xff]
    %v48 = vld [vmem:[%s1 + $0x58] sm:$0xff]
    %v49 = vld [vmem:[%s1 + $0x60] sm:$0xff]
    %v50 = vld [vmem:[%s1 + $0x68] sm:$0xff]
    %v51 = vld [vmem:[%s1 + $0x70] sm:$0xff]
    %v52 = vld [vmem:[%s1 + $0x78] sm:$0xff]
    %v53 = vld [vmem:[%s1 + $0x80] sm:$0xff]
    %v54 = vld [vmem:[%s1 + $0x88] sm:$0xff]
    %v55 = vld [vmem:[%s1 + $0x90] sm:$0xff]
    %v56 = vld [vmem:[%s1 + $0x98] sm:$0xff]
    %v57 = vld [vmem:[%s1 + $0xa0] sm:$0xff]
    %v58 = vld [vmem:[%s1 + $0xa8] sm:$0xff]
    %v59 = vld [vmem:[%s1 + $0xb0] sm:$0xff]
    %v60 = vld [vmem:[%s1 + $0xb8] sm:$0xff]
    %v61 = vld [vmem:[%s1 + $0xc0] sm:$0xff]
    %v62 = vld [vmem:[%s1 + $0xc8] sm:$0xff]
    %v63 = vld [vmem:[%s1 + $0xd0] sm:$0xff]
    %v64 = vld [vmem:[%s1 + $0xd8] sm:$0xff]
    %v65 = vld [vmem:[%s1 + $0xe0] sm:$0xff]
    %v66 = vld [vmem:[%s1 + $0xe8] sm:$0xff]
    %v67 = vld [vmem:[%s1 + $0xf0] sm:$0xff]
    %v68 = vld [vmem:[%s1 + $0xf8] sm:$0xff]
    %v69 = vld [vmem:[%s2] sm:$0x1]
    %v71 = vperm.slane %v69, 0
    %73 = vmatpush.msra.mxu0 %v52
    %74 = vmatpush.msra.mxu0 %v51
    %75 = vmatpush.msra.mxu0 %v50
    %76 = vmatpush.msra.mxu0 %v49
    %77 = vmatpush.msra.mxu0 %v48
    %78 = vmatpush.msra.mxu0 %v47
    %79 = vmatpush.msra.mxu0 %v46
    %80 = vmatpush.msra.mxu0 %v45
    %81 = vmatpush.msra.mxu0 %v44
    %82 = vmatpush.msra.mxu0 %v43
    %83 = vmatpush.msra.mxu0 %v42
    %84 = vmatpush.msra.mxu0 %v41
    %85 = vmatpush.msra.mxu0 %v40
    %86 = vmatpush.msra.mxu0 %v39
    %87 = vmatpush.msra.mxu0 %v38
    %88 = vmatpush.msra.mxu0 %v37
    %89 = vmatmul.f32.gmra.mxu0 %v33
    %v90 = vpop.f32.mrf.mxu0
    %v91 = vadd.f32 %v71, %v90
    %92 = vmatmul.f32.gmra.mxu0 %v35
    %v93 = vpop.f32.mrf.mxu0
    %v94 = vadd.f32 %v71, %v93
    %95 = vdwg.mxu0
    %96 = vmatpush.msra.mxu0 %v68
    %97 = vmatpush.msra.mxu0 %v67
    %98 = vmatpush.msra.mxu0 %v66
    %99 = vmatpush.msra.mxu0 %v65
    %100 = vmatpush.msra.mxu0 %v64
    %101 = vmatpush.msra.mxu0 %v63
    %102 = vmatpush.msra.mxu0 %v62
    %103 = vmatpush.msra.mxu0 %v61
    %104 = vmatpush.msra.mxu0 %v60
    %105 = vmatpush.msra.mxu0 %v59
    %106 = vmatpush.msra.mxu0 %v58
    %107 = vmatpush.msra.mxu0 %v57
    %108 = vmatpush.msra.mxu0 %v56
    %109 = vmatpush.msra.mxu0 %v55
    %110 = vmatpush.msra.mxu0 %v54
    %111 = vmatpush.msra.mxu0 %v53
    %112 = vmatmul.f32.gmra.mxu0 %v34
    %v113 = vpop.f32.mrf.mxu0
    %v114 = vadd.f32 %v91, %v113
    %115 = vmatmul.f32.gmra.mxu0 %v36
    %v116 = vpop.f32.mrf.mxu0
    %v117 = vadd.f32 %v94, %v116
    %118 = vdwg.mxu0
    %v119 = vmax.f32 %v114, 0.0
    %v120 = vmax.f32 %v117, 0.0
    %v121 = vld [vmem:[%s3] sm:$0xff]
    %v122 = vld [vmem:[%s3 + $0x8] sm:$0xff]
    %v123 = vld [vmem:[%s3 + $0x10] sm:$0xff]
    %v124 = vld [vmem:[%s3 + $0x18] sm:$0xff]
    %v125 = vld [vmem:[%s3 + $0x20] sm:$0xff]
    %v126 = vld [vmem:[%s3 + $0x28] sm:$0xff]
    %v127 = vld [vmem:[%s3 + $0x30] sm:$0xff]
    %v128 = vld [vmem:[%s3 + $0x38] sm:$0xff]
    %v129 = vld [vmem:[%s4] sm:$0x3]
    %v131 = vperm.slane %v129, 0
    %v132 = vperm.slane %v129, 1
    %vm135 = vcmask 261120
    %v137 = vsel %vm135, %v119, 0
    %v140 = vsel %vm135, %v120, 0
    %142 = vmatpush.msra.mxu0 0.0
    %143 = vmatpush.msra.mxu0 0.0
    %144 = vmatpush.msra.mxu0 0.0
    %145 = vmatpush.msra.mxu0 0.0
    %146 = vmatpush.msra.mxu0 0.0
    %147 = vmatpush.msra.mxu0 0.0
    %148 = vmatpush.msra.mxu0 0.0
    %149 = vmatpush.msra.mxu0 0.0
    %150 = vmatpush.msra.mxu0 0.0
    %151 = vmatpush.msra.mxu0 0.0
    %152 = vmatpush.msra.mxu0 0.0
    %153 = vmatpush.msra.mxu0 0.0
    %154 = vmatpush.msra.mxu0 %v127
    %155 = vmatpush.msra.mxu0 %v125
    %156 = vmatpush.msra.mxu0 %v123
    %157 = vmatpush.msra.mxu0 %v121
    %158 = vmatmul.f32.gmra.mxu0 %v137
    %v159 = vpop.f32.mrf.mxu0
    %v160 = vadd.f32 %v131, %v159
    %161 = vmatmul.f32.gmra.mxu0 %v140
    %v162 = vpop.f32.mrf.mxu0
    %v163 = vadd.f32 %v131, %v162
    %164 = vdwg.mxu0
    %165 = vmatpush.msra.mxu0 0.0
    %166 = vmatpush.msra.mxu0 0.0
    %167 = vmatpush.msra.mxu0 0.0
    %168 = vmatpush.msra.mxu0 0.0
    %169 = vmatpush.msra.mxu0 0.0
    %170 = vmatpush.msra.mxu0 0.0
    %171 = vmatpush.msra.mxu0 0.0
    %172 = vmatpush.msra.mxu0 0.0
    %173 = vmatpush.msra.mxu0 0.0
    %174 = vmatpush.msra.mxu0 0.0
    %175 = vmatpush.msra.mxu0 0.0
    %176 = vmatpush.msra.mxu0 0.0
    %177 = vmatpush.msra.mxu0 %v128
    %178 = vmatpush.msra.mxu0 %v126
    %179 = vmatpush.msra.mxu0 %v124
    %180 = vmatpush.msra.mxu0 %v122
    %181 = vmatmul.f32.gmra.mxu0 %v137
    %v182 = vpop.f32.mrf.mxu0
    %v183 = vadd.f32 %v132, %v182
    %184 = vmatmul.f32.gmra.mxu0 %v140
    %v185 = vpop.f32.mrf.mxu0
    %v186 = vadd.f32 %v132, %v185
    %187 = vdwg.mxu0
    %v188 = vadd.f32 %v160, %v183
    %189 = vadd.xlane.f32.xlu0 %v188
    %v190 = vpop.xlane.xlu0 %189
    %v191 = vadd.f32 %v163, %v186
    %192 = vadd.xlane.f32.xlu0 %v191
    %v193 = vpop.xlane.xlu0 %192
    %v194 = vrcp.pop 256.0
    %v195 = vmul.f32 256.0, %v194
    %v196 = vsub.f32 1.0, %v195
    %v197 = vmul.f32 %v194, %v196
    %v198 = vadd.f32 %v194, %v197
    %vm199 = vweird.f32 %v194
    %v200 = vsel %vm199, %v194, %v198
    %v201 = vmul.f32 %v190, %v200
    %v202 = vmul.f32 %v193, %v200
    %203 = vxpose.xlu0.b32.start [1/16] %v201, 128
    %204 = vxpose.xlu0.b32.cont [2/16] 0.0, 128
    %205 = vxpose.xlu0.b32.cont [3/16] 0.0, 128
    %206 = vxpose.xlu0.b32.cont [4/16] 0.0, 128
    %207 = vxpose.xlu0.b32.cont [5/16] 0.0, 128
    %208 = vxpose.xlu0.b32.cont [6/16] 0.0, 128
    %209 = vxpose.xlu0.b32.cont [7/16] 0.0, 128
    %210 = vxpose.xlu0.b32.cont [8/16] 0.0, 128
    %211 = vxpose.xlu0.b32.cont [9/16] 0.0, 128
    %212 = vxpose.xlu0.b32.cont [10/16] 0.0, 128
    %213 = vxpose.xlu0.b32.cont [11/16] 0.0, 128
    %214 = vxpose.xlu0.b32.cont [12/16] 0.0, 128
    %215 = vxpose.xlu0.b32.cont [13/16] 0.0, 128
    %216 = vxpose.xlu0.b32.cont [14/16] 0.0, 128
    %217 = vxpose.xlu0.b32.cont [15/16] 0.0, 128
    %218 = vxpose.xlu0.b32.end [16/16] 0.0, 128
    %v219 = vpop.trf.xlu0
    %v220 = vpop.trf.xlu0
    %v221 = vpop.trf.xlu0
    %v222 = vpop.trf.xlu0
    %v223 = vpop.trf.xlu0
    %v224 = vpop.trf.xlu0
    %v225 = vpop.trf.xlu0
    %v226 = vpop.trf.xlu0
    %v227 = vpop.trf.xlu0
    %v228 = vpop.trf.xlu0
    %v229 = vpop.trf.xlu0
    %v230 = vpop.trf.xlu0
    %v231 = vpop.trf.xlu0
    %v232 = vpop.trf.xlu0
    %v233 = vpop.trf.xlu0
    %v234 = vpop.trf.xlu0
    %235 = vxpose.xlu0.b32.start [1/16] %v202, 128
    %236 = vxpose.xlu0.b32.cont [2/16] 0.0, 128
    %237 = vxpose.xlu0.b32.cont [3/16] 0.0, 128
    %238 = vxpose.xlu0.b32.cont [4/16] 0.0, 128
    %239 = vxpose.xlu0.b32.cont [5/16] 0.0, 128
    %240 = vxpose.xlu0.b32.cont [6/16] 0.0, 128
    %241 = vxpose.xlu0.b32.cont [7/16] 0.0, 128
    %242 = vxpose.xlu0.b32.cont [8/16] 0.0, 128
    %243 = vxpose.xlu0.b32.cont [9/16] 0.0, 128
    %244 = vxpose.xlu0.b32.cont [10/16] 0.0, 128
    %245 = vxpose.xlu0.b32.cont [11/16] 0.0, 128
    %246 = vxpose.xlu0.b32.cont [12/16] 0.0, 128
    %247 = vxpose.xlu0.b32.cont [13/16] 0.0, 128
    %248 = vxpose.xlu0.b32.cont [14/16] 0.0, 128
    %249 = vxpose.xlu0.b32.cont [15/16] 0.0, 128
    %250 = vxpose.xlu0.b32.end [16/16] 0.0, 128
    %v251 = vpop.trf.xlu0
    %v252 = vpop.trf.xlu0
    %v253 = vpop.trf.xlu0
    %v254 = vpop.trf.xlu0
    %v255 = vpop.trf.xlu0
    %v256 = vpop.trf.xlu0
    %v257 = vpop.trf.xlu0
    %v258 = vpop.trf.xlu0
    %v259 = vpop.trf.xlu0
    %v260 = vpop.trf.xlu0
    %v261 = vpop.trf.xlu0
    %v262 = vpop.trf.xlu0
    %v263 = vpop.trf.xlu0
    %v264 = vpop.trf.xlu0
    %v265 = vpop.trf.xlu0
    %v266 = vpop.trf.xlu0
    %v267 = vperm.slane %v219, 0
    %v268 = vperm.slane %v251, 0
    %v269 = vsub.f32 %v267, %v201
    %v270 = vsub.f32 %v268, %v202
    %v271 = vmul.f32 %v269, %v269
    %v272 = vmul.f32 %v270, %v270
    %v273 = vsub.f32 0.0, %v271
    %v274 = vsub.f32 0.0, %v272
    %v275 = vmul.f32 %v273, 1.442695
    %v276 = vpow.pop %v275
    %v277 = vmul.f32 %v274, 1.442695
    %v278 = vpow.pop %v277
    %vm279 = vcmask 64512
    %v280 = vsel %vm279, %v276, 0.0
    %281 = vadd.xlane.f32.xlu0 %v280
    %v282 = vpop.xlane.xlu0 %281
    %v283 = vsel %vm279, %v278, 0.0
    %284 = vadd.xlane.f32.xlu0 %v283
    %v285 = vpop.xlane.xlu0 %284
    %v286 = vrcp.pop %v282
    %v287 = vmul.f32 %v282, %v286
    %v288 = vsub.f32 1.0, %v287
    %v289 = vmul.f32 %v286, %v288
    %v290 = vadd.f32 %v286, %v289
    %vm291 = vweird.f32 %v282
    %vm292 = vweird.f32 %v286
    %vm293 = vmor %vm291, %vm292
    %v294 = vsel %vm293, %v286, %v290
    %v295 = vand.u32 2147483647, %v282
    %vm296 = vcmp.eq.f32.partialorder %v295, 8.507059e+37
    %v297 = vand.u32 %v282, 2147483648
    %v298 = vor.u32 1.1754944e-38, %v297
    %v299 = vsel %vm296, %v298, %v294
    %v300 = vrcp.pop %v285
    %v301 = vmul.f32 %v285, %v300
    %v302 = vsub.f32 1.0, %v301
    %v303 = vmul.f32 %v300, %v302
    %v304 = vadd.f32 %v300, %v303
    %vm305 = vweird.f32 %v285
    %vm306 = vweird.f32 %v300
    %vm307 = vmor %vm305, %vm306
    %v308 = vsel %vm307, %v300, %v304
    %v309 = vand.u32 2147483647, %v285
    %vm310 = vcmp.eq.f32.partialorder %v309, 8.507059e+37
    %v311 = vand.u32 %v285, 2147483648
    %v312 = vor.u32 1.1754944e-38, %v311
    %v313 = vsel %vm310, %v312, %v308
    %v314 = vmul.f32 %v276, %v299
    %v315 = vmul.f32 %v278, %v313
    %v317 = vsel %vm279, %v314, 0
    %319 = vmatpush.msra.mxu0 0.0
    %320 = vmatpush.msra.mxu0 0.0
    %321 = vmatpush.msra.mxu0 0.0
    %322 = vmatpush.msra.mxu0 0.0
    %323 = vmatpush.msra.mxu0 0.0
    %324 = vmatpush.msra.mxu0 0.0
    %325 = vmatpush.msra.mxu0 0.0
    %326 = vmatpush.msra.mxu0 0.0
    %327 = vmatpush.msra.mxu0 0.0
    %328 = vmatpush.msra.mxu0 0.0
    %329 = vmatpush.msra.mxu0 0.0
    %330 = vmatpush.msra.mxu0 0.0
    %331 = vmatpush.msra.mxu0 0.0
    %332 = vmatpush.msra.mxu0 0.0
    %333 = vmatpush.msra.mxu0 0.0
    %334 = vmatpush.msra.mxu0 %v160
    %335 = vmatmul.f32.gmra.mxu0 %v317
    %v336 = vpop.f32.mrf.mxu0
    %v337 = vadd.f32 0.0, %v336
    %338 = vdwg.mxu0
    %339 = vmatpush.msra.mxu0 0.0
    %340 = vmatpush.msra.mxu0 0.0
    %341 = vmatpush.msra.mxu0 0.0
    %342 = vmatpush.msra.mxu0 0.0
    %343 = vmatpush.msra.mxu0 0.0
    %344 = vmatpush.msra.mxu0 0.0
    %345 = vmatpush.msra.mxu0 0.0
    %346 = vmatpush.msra.mxu0 0.0
    %347 = vmatpush.msra.mxu0 0.0
    %348 = vmatpush.msra.mxu0 0.0
    %349 = vmatpush.msra.mxu0 0.0
    %350 = vmatpush.msra.mxu0 0.0
    %351 = vmatpush.msra.mxu0 0.0
    %352 = vmatpush.msra.mxu0 0.0
    %353 = vmatpush.msra.mxu0 0.0
    %354 = vmatpush.msra.mxu0 %v183
    %355 = vmatmul.f32.gmra.mxu0 %v317
    %v356 = vpop.f32.mrf.mxu0
    %v357 = vadd.f32 0.0, %v356
    %358 = vdwg.mxu0
    %v360 = vsel %vm279, %v315, 0
    %362 = vmatpush.msra.mxu0 0.0
    %363 = vmatpush.msra.mxu0 0.0
    %364 = vmatpush.msra.mxu0 0.0
    %365 = vmatpush.msra.mxu0 0.0
    %366 = vmatpush.msra.mxu0 0.0
    %367 = vmatpush.msra.mxu0 0.0
    %368 = vmatpush.msra.mxu0 0.0
    %369 = vmatpush.msra.mxu0 0.0
    %370 = vmatpush.msra.mxu0 0.0
    %371 = vmatpush.msra.mxu0 0.0
    %372 = vmatpush.msra.mxu0 0.0
    %373 = vmatpush.msra.mxu0 0.0
    %374 = vmatpush.msra.mxu0 0.0
    %375 = vmatpush.msra.mxu0 0.0
    %376 = vmatpush.msra.mxu0 0.0
    %377 = vmatpush.msra.mxu0 %v163
    %378 = vmatmul.f32.gmra.mxu0 %v360
    %v379 = vpop.f32.mrf.mxu0
    %v380 = vadd.f32 0.0, %v379
    %381 = vdwg.mxu0
    %382 = vmatpush.msra.mxu0 0.0
    %383 = vmatpush.msra.mxu0 0.0
    %384 = vmatpush.msra.mxu0 0.0
    %385 = vmatpush.msra.mxu0 0.0
    %386 = vmatpush.msra.mxu0 0.0
    %387 = vmatpush.msra.mxu0 0.0
    %388 = vmatpush.msra.mxu0 0.0
    %389 = vmatpush.msra.mxu0 0.0
    %390 = vmatpush.msra.mxu0 0.0
    %391 = vmatpush.msra.mxu0 0.0
    %392 = vmatpush.msra.mxu0 0.0
    %393 = vmatpush.msra.mxu0 0.0
    %394 = vmatpush.msra.mxu0 0.0
    %395 = vmatpush.msra.mxu0 0.0
    %396 = vmatpush.msra.mxu0 0.0
    %397 = vmatpush.msra.mxu0 %v186
    %398 = vmatmul.f32.gmra.mxu0 %v360
    %v399 = vpop.f32.mrf.mxu0
    %v400 = vadd.f32 0.0, %v399
    %401 = vdwg.mxu0
    %v402 = vld [vmem:[%s5] sm:$0xff]
    %v403 = vld [vmem:[%s5 + $0x8] sm:$0xff]
    %v404 = vld [vmem:[%s5 + $0x10] sm:$0xff]
    %v405 = vld [vmem:[%s5 + $0x18] sm:$0xff]
    %v406 = vld [vmem:[%s5 + $0x20] sm:$0xff]
    %v407 = vld [vmem:[%s5 + $0x28] sm:$0xff]
    %v408 = vld [vmem:[%s5 + $0x30] sm:$0xff]
    %v409 = vld [vmem:[%s5 + $0x38] sm:$0xff]
    %v410 = vld [vmem:[%s5 + $0x40] sm:$0xff]
    %v411 = vld [vmem:[%s5 + $0x48] sm:$0xff]
    %v412 = vld [vmem:[%s5 + $0x50] sm:$0xff]
    %v413 = vld [vmem:[%s5 + $0x58] sm:$0xff]
    %v414 = vld [vmem:[%s5 + $0x60] sm:$0xff]
    %v415 = vld [vmem:[%s5 + $0x68] sm:$0xff]
    %v416 = vld [vmem:[%s5 + $0x70] sm:$0xff]
    %v417 = vld [vmem:[%s5 + $0x78] sm:$0xff]
    %v418 = vld [vmem:[%s5 + $0x80] sm:$0xff]
    %v419 = vld [vmem:[%s5 + $0x88] sm:$0xff]
    %v420 = vld [vmem:[%s5 + $0x90] sm:$0xff]
    %v421 = vld [vmem:[%s5 + $0x98] sm:$0xff]
    %v422 = vld [vmem:[%s5 + $0xa0] sm:$0xff]
    %v423 = vld [vmem:[%s5 + $0xa8] sm:$0xff]
    %v424 = vld [vmem:[%s5 + $0xb0] sm:$0xff]
    %v425 = vld [vmem:[%s5 + $0xb8] sm:$0xff]
    %v426 = vld [vmem:[%s5 + $0xc0] sm:$0xff]
    %v427 = vld [vmem:[%s5 + $0xc8] sm:$0xff]
    %v428 = vld [vmem:[%s5 + $0xd0] sm:$0xff]
    %v429 = vld [vmem:[%s5 + $0xd8] sm:$0xff]
    %v430 = vld [vmem:[%s5 + $0xe0] sm:$0xff]
    %v431 = vld [vmem:[%s5 + $0xe8] sm:$0xff]
    %v432 = vld [vmem:[%s5 + $0xf0] sm:$0xff]
    %v433 = vld [vmem:[%s5 + $0xf8] sm:$0xff]
    %v434 = vld [vmem:[%s6] sm:$0x1]
    %v436 = vperm.slane %v434, 0
    %438 = vmatpush.msra.mxu0 %v417
    %439 = vmatpush.msra.mxu0 %v416
    %440 = vmatpush.msra.mxu0 %v415
    %441 = vmatpush.msra.mxu0 %v414
    %442 = vmatpush.msra.mxu0 %v413
    %443 = vmatpush.msra.mxu0 %v412
    %444 = vmatpush.msra.mxu0 %v411
    %445 = vmatpush.msra.mxu0 %v410
    %446 = vmatpush.msra.mxu0 %v409
    %447 = vmatpush.msra.mxu0 %v408
    %448 = vmatpush.msra.mxu0 %v407
    %449 = vmatpush.msra.mxu0 %v406
    %450 = vmatpush.msra.mxu0 %v405
    %451 = vmatpush.msra.mxu0 %v404
    %452 = vmatpush.msra.mxu0 %v403
    %453 = vmatpush.msra.mxu0 %v402
    %454 = vmatmul.f32.gmra.mxu0 %v337
    %v455 = vpop.f32.mrf.mxu0
    %v456 = vadd.f32 %v436, %v455
    %457 = vmatmul.f32.gmra.mxu0 %v380
    %v458 = vpop.f32.mrf.mxu0
    %v459 = vadd.f32 %v436, %v458
    %460 = vdwg.mxu0
    %461 = vmatpush.msra.mxu0 %v433
    %462 = vmatpush.msra.mxu0 %v432
    %463 = vmatpush.msra.mxu0 %v431
    %464 = vmatpush.msra.mxu0 %v430
    %465 = vmatpush.msra.mxu0 %v429
    %466 = vmatpush.msra.mxu0 %v428
    %467 = vmatpush.msra.mxu0 %v427
    %468 = vmatpush.msra.mxu0 %v426
    %469 = vmatpush.msra.mxu0 %v425
    %470 = vmatpush.msra.mxu0 %v424
    %471 = vmatpush.msra.mxu0 %v423
    %472 = vmatpush.msra.mxu0 %v422
    %473 = vmatpush.msra.mxu0 %v421
    %474 = vmatpush.msra.mxu0 %v420
    %475 = vmatpush.msra.mxu0 %v419
    %476 = vmatpush.msra.mxu0 %v418
    %477 = vmatmul.f32.gmra.mxu0 %v357
    %v478 = vpop.f32.mrf.mxu0
    %v479 = vadd.f32 %v456, %v478
    %480 = vmatmul.f32.gmra.mxu0 %v400
    %v481 = vpop.f32.mrf.mxu0
    %v482 = vadd.f32 %v459, %v481
    %483 = vdwg.mxu0
    %v484 = vmax.f32 %v479, 0.0
    %v485 = vmax.f32 %v482, 0.0
    %v486 = vld [vmem:[%s7] sm:$0xff]
    %v487 = vld [vmem:[%s7 + $0x8] sm:$0xff]
    %v488 = vld [vmem:[%s7 + $0x10] sm:$0xff]
    %v489 = vld [vmem:[%s7 + $0x18] sm:$0xff]
    %v490 = vld [vmem:[%s7 + $0x20] sm:$0xff]
    %v491 = vld [vmem:[%s7 + $0x28] sm:$0xff]
    %v492 = vld [vmem:[%s7 + $0x30] sm:$0xff]
    %v493 = vld [vmem:[%s7 + $0x38] sm:$0xff]
    %v494 = vld [vmem:[%s8] sm:$0x3]
    %v496 = vperm.slane %v494, 0
    %v497 = vperm.slane %v494, 1
    %v501 = vsel %vm135, %v484, 0
    %v504 = vsel %vm135, %v485, 0
    %506 = vmatpush.msra.mxu0 0.0
    %507 = vmatpush.msra.mxu0 0.0
    %508 = vmatpush.msra.mxu0 0.0
    %509 = vmatpush.msra.mxu0 0.0
    %510 = vmatpush.msra.mxu0 0.0
    %511 = vmatpush.msra.mxu0 0.0
    %512 = vmatpush.msra.mxu0 0.0
    %513 = vmatpush.msra.mxu0 0.0
    %514 = vmatpush.msra.mxu0 0.0
    %515 = vmatpush.msra.mxu0 0.0
    %516 = vmatpush.msra.mxu0 0.0
    %517 = vmatpush.msra.mxu0 0.0
    %518 = vmatpush.msra.mxu0 %v492
    %519 = vmatpush.msra.mxu0 %v490
    %520 = vmatpush.msra.mxu0 %v488
    %521 = vmatpush.msra.mxu0 %v486
    %522 = vmatmul.f32.gmra.mxu0 %v501
    %v523 = vpop.f32.mrf.mxu0
    %v524 = vadd.f32 %v496, %v523
    %525 = vmatmul.f32.gmra.mxu0 %v504
    %v526 = vpop.f32.mrf.mxu0
    %v527 = vadd.f32 %v496, %v526
    %528 = vdwg.mxu0
    %529 = vmatpush.msra.mxu0 0.0
    %530 = vmatpush.msra.mxu0 0.0
    %531 = vmatpush.msra.mxu0 0.0
    %532 = vmatpush.msra.mxu0 0.0
    %533 = vmatpush.msra.mxu0 0.0
    %534 = vmatpush.msra.mxu0 0.0
    %535 = vmatpush.msra.mxu0 0.0
    %536 = vmatpush.msra.mxu0 0.0
    %537 = vmatpush.msra.mxu0 0.0
    %538 = vmatpush.msra.mxu0 0.0
    %539 = vmatpush.msra.mxu0 0.0
    %540 = vmatpush.msra.mxu0 0.0
    %541 = vmatpush.msra.mxu0 %v493
    %542 = vmatpush.msra.mxu0 %v491
    %543 = vmatpush.msra.mxu0 %v489
    %544 = vmatpush.msra.mxu0 %v487
    %545 = vmatmul.f32.gmra.mxu0 %v501
    %v546 = vpop.f32.mrf.mxu0
    %v547 = vadd.f32 %v497, %v546
    %548 = vmatmul.f32.gmra.mxu0 %v504
    %v549 = vpop.f32.mrf.mxu0
    %v550 = vadd.f32 %v497, %v549
    %551 = vdwg.mxu0
    %v552 = vadd.f32 %v33, %v524
    %v553 = vadd.f32 %v34, %v547
    %v554 = vadd.f32 %v35, %v527
    %v555 = vadd.f32 %v36, %v550
    %v556 = vmax.f32 %v552, 0.0
    %v557 = vmax.f32 %v553, 0.0
    %v558 = vmax.f32 %v554, 0.0
    %v559 = vmax.f32 %v555, 0.0
    %560 = vst [vmem:[#allocation2] sm:$0xff] %v556
    %561 = vst [vmem:[#allocation2 + $0x8] sm:$0xff] %v557
    %562 = vst [vmem:[#allocation2 + $0x10] sm:$0xff] %v558
    %563 = vst [vmem:[#allocation2 + $0x18] sm:$0xff] %v559
    // Predicated region
    $region38: #{tpu_custom_call.1} parent=1 // pred_check
      _
    $region39: #{tpu_custom_call.1} parent=1 // pred_check_branch
      %565 = sbr.rel (0) target = $region41
    $region40: #{tpu_custom_call.1} parent=1 // pred_region
      %567 = vsyncadd [#allocation3], 0
      %s568 = sshll.u32 [#allocation2], 4
      %s569 = int_to_ptr.vmem [resolvable:$true] %s568
      %s570 = sshll.u32 %s9, 4
      %s571 = int_to_ptr.hbm [resolvable:$true] %s570
      %576 = dma.vmem_to_hbm [thread:$0]  %s569, 512, %s571, [#allocation3], 256, 256, 16
    $region41: #{tpu_custom_call.1} parent=1 // pred_fallthru
      _
    // Predicated region
    $region42: #{tpu_custom_call.1} parent=1 // pred_check
      _
    $region43: #{tpu_custom_call.1} parent=1 // pred_check_branch
      %578 = sbr.rel (0) target = $region45
    $region44: #{tpu_custom_call.1} parent=1 // pred_region
      %580 = dma.done [#allocation3], 512
    $region45: #{tpu_custom_call.1} parent=1 // pred_fallthru
      _
    %581 = vsyncpa [#allocation3], 1

</llo_original>
